<compile_context>
chip_gen: v7x
topology: tpu7x:2x2x1
jax: 0.10.0
libtpu: 0.0.40
codegen_flags: <defaults>
</compile_context>

<pallas_src>
import functools

import jax
import jax.numpy as jnp
from jax.experimental import pallas as pl
from jax.experimental.pallas import tpu as pltpu


def la_block_kernel(x_ref, w_qkv_ref, b_qkv_ref, wo_ref, bo_ref, mask_ref, out_ref,
                    *, heads, dim_head, seq_len, matmul_dtype, approx_recip,
                    eps=1e-5):
    rows, d = x_ref.shape                     # (block_b * N, D)
    n = seq_len
    bb = rows // n
    inner = heads * dim_head

    # ---- LayerNorm statistics (affine folded into w_qkv / b_qkv by the wrapper) ----
    x = x_ref[...].astype(jnp.float32)                         # (rows, D)
    mu = jnp.mean(x, axis=-1, keepdims=True)
    var = jnp.mean(jnp.square(x - mu), axis=-1, keepdims=True)
    xn = (x - mu) * jax.lax.rsqrt(var + eps)

    # ---- fused QKV projection: one MXU matmul, f32 accumulation ----
    qkv = jnp.dot(xn.astype(matmul_dtype), w_qkv_ref[...],
                  preferred_element_type=jnp.float32) + b_qkv_ref[...]
    qkv = qkv.astype(matmul_dtype)             # single cast shared by q / k / v

    q = qkv[:, :inner].reshape(bb, n, inner)           # (bb, N, inner), heads in lanes
    k = qkv[:, inner:2 * inner].reshape(bb, n, inner)  # attn scale pre-folded into W_q
    v = qkv[:, 2 * inner:].reshape(bb, n, inner)

    # ---- block-diagonal-over-heads K / V (no per-head lane slicing) ----
    # mask[h*N + j, c] = 1 iff lane c belongs to head h.
    mask = mask_ref[...]                                          # (heads*N, inner)
    k_bd = jnp.concatenate([k] * heads, axis=1) * mask            # (bb, heads*N, inner)
    v_rep = jnp.concatenate([v] * heads, axis=1)
    # Append the mask itself to V: the attn@V matmul then also produces the per-head
    # softmax denominator, already replicated across that head's dim_head lanes.
    v_aug = jnp.concatenate([v_rep * mask,
                             jnp.broadcast_to(mask, v_rep.shape)], axis=-1)

    # ---- attention: one batched matmul per stage (batch = block_b) ----
    # sim[b, i, h*N + j] = <q_h[b, i], k_h[b, j]>
    sim = jnp.einsum('bic,brc->bir', q, k_bd,
                     preferred_element_type=jnp.float32)          # (bb, N, heads*N)
    # Global row max is a valid softmax shift (it cancels); avoids per-head
    # lane-group max reductions.
    m = jnp.max(sim, axis=-1, keepdims=True)
    p = jnp.exp(sim - m)

    ov = jnp.einsum('bir,brc->bic', p.astype(matmul_dtype), v_aug,
                    preferred_element_type=jnp.float32)           # (bb, N, 2*inner)
    # lanes [:inner]  = unnormalised per-head outputs (heads merged h-major)
    # lanes [inner:]  = per-head softmax denominators, lane-aligned with the outputs
    o = ov[..., :inner] * pl.reciprocal(ov[..., inner:], approx=approx_recip)

    # ---- output projection + bias + residual (re-read x_ref: short live range) ----
    y = jnp.dot(o.reshape(rows, inner).astype(matmul_dtype), wo_ref[...],
                preferred_element_type=jnp.float32) + bo_ref[...]
    y = (y + x_ref[...].astype(jnp.float32)).reshape(bb, n, d)

    # ---- lane-dense writeback: assemble (bb, N*D) so the store last dim is 256 ----
    # N (=8) static lane concats: layout plumbing, far cheaper than masked stores.
    out_ref[...] = jnp.concatenate([y[:, i, :] for i in range(n)],
                                   axis=-1).astype(out_ref.dtype)


def prepare_la_block_params(params, *, heads, dim_head, seq_len,
                            matmul_dtype=jnp.bfloat16):
    """One-time parameter preparation (hoisted out of the per-call wrapper).

    Fuses W_q (pre-scaled by dim_head**-0.5) with W_kv, folds the LayerNorm affine
    into the fused projection (exact), pre-casts MXU operands, and builds the
    block-diagonal head mask.
    """
    wq, wkv = params["wq"], params["wkv"]
    d = wq.shape[0]
    inner = heads * dim_head
    scale = dim_head ** -0.5

    w_cat = jnp.concatenate([wq * scale, wkv], axis=-1).astype(jnp.float32)  # (D, 3*inner)
    ln_w = params["ln_w"].reshape(d, 1).astype(jnp.float32)
    ln_b = params["ln_b"].reshape(1, d).astype(jnp.float32)
    w_qkv = (w_cat * ln_w).astype(matmul_dtype)      # LN scale folded into rows
    b_qkv = (ln_b @ w_cat).astype(jnp.float32)       # LN shift folded into a bias

    # mask[h*N + j, c] = 1 iff lane c belongs to head h.  Reused for K/V expansion
    # and (appended to V) for the per-head softmax denominators.
    row_head = jnp.arange(heads * seq_len)[:, None] // seq_len
    col_head = jnp.arange(inner)[None, :] // dim_head
    mask = (row_head == col_head).astype(matmul_dtype)

    return {
        "w_qkv": w_qkv,                                  # (D, 3*inner)
        "b_qkv": b_qkv,                                  # (1, 3*inner)
        "wo": params["wo"].astype(matmul_dtype),         # (inner, D)
        "bo": params["bo"].reshape(1, d).astype(jnp.float32),
        "mask": mask,                                    # (heads*N, inner)
    }


def la_block(x, prep, *, heads, dim_head, block_b=None,
             matmul_dtype=jnp.bfloat16):
    """Fused LayerNorm + LocalAttention + residual (forward of LABlock)."""
    B, N, D = x.shape
    inner = heads * dim_head

    if block_b is None:
        # One fat grid step for small batches (per-step overhead ~0.35us dominates);
        # split across a parallel grid (v7x: 2 TensorCores) only when each core still
        # gets >= 256 projection rows and block shapes stay (8,128)-friendly.
        if B % 2 == 0 and (B // 2) % 8 == 0 and (B // 2) * N >= 256:
            block_b = B // 2
        else:
            block_b = B
    assert B % block_b == 0, "block_b must divide the batch size"
    grid = (B // block_b,)

    x_rows = x.reshape(B * N, D)          # free row-major leading-dim merge

    approx = matmul_dtype != jnp.float32  # exact reciprocal on the f32 path
    kernel = functools.partial(la_block_kernel, heads=heads, dim_head=dim_head,
                               seq_len=N, matmul_dtype=matmul_dtype,
                               approx_recip=approx)

    out = pl.pallas_call(
        kernel,
        out_shape=jax.ShapeDtypeStruct((B, N * D), x.dtype),   # lane-dense output
        grid=grid,
        in_specs=[
            pl.BlockSpec((block_b * N, D), lambda b: (b, 0)),          # x rows
            pl.BlockSpec((D, 3 * inner), lambda b: (0, 0)),            # fused W_qkv
            pl.BlockSpec((1, 3 * inner), lambda b: (0, 0)),            # fused b_qkv
            pl.BlockSpec((inner, D), lambda b: (0, 0)),                # W_out
            pl.BlockSpec((1, D), lambda b: (0, 0)),                    # b_out
            pl.BlockSpec((heads * N, inner), lambda b: (0, 0)),        # head mask
        ],
        out_specs=pl.BlockSpec((block_b, N * D), lambda b: (b, 0)),
        compiler_params=pltpu.CompilerParams(
            dimension_semantics=("parallel",)),
    )(x_rows, prep["w_qkv"], prep["b_qkv"], prep["wo"], prep["bo"], prep["mask"])

    return out.reshape(B, N, D)


def la_block_ref(x, params, *, heads, dim_head):
    """Pure-JAX reference matching the PyTorch LABlock forward (f32 throughout)."""
    B, N, D = x.shape
    inner = heads * dim_head
    mu = x.mean(-1, keepdims=True)
    var = ((x - mu) ** 2).mean(-1, keepdims=True)
    xn = (x - mu) / jnp.sqrt(var + 1e-5) * params["ln_w"][0] + params["ln_b"][0]
    q = xn @ params["wq"]
    kv = xn @ params["wkv"]
    k, v = kv[..., :inner], kv[..., inner:]

    def split(t):
        return t.reshape(B, N, heads, dim_head).transpose(0, 2, 1, 3)

    qh, kh, vh = split(q) * dim_head ** -0.5, split(k), split(v)
    sim = jnp.einsum('bhid,bhjd->bhij', qh, kh)
    attn = jax.nn.softmax(sim, axis=-1)
    o = jnp.einsum('bhij,bhjd->bhid', attn, vh)
    o = o.transpose(0, 2, 1, 3).reshape(B, N, inner)
    return o @ params["wo"] + params["bo"][0] + x


if __name__ == "__main__":
    # Small shapes consistent with the module: args.hcam.dim=32, heads=4, dim_head=8
    B, N, D = 2, 8, 32
    heads, dim_head = 4, 8
    inner = heads * dim_head

    key = jax.random.PRNGKey(0)
    kx, kq, kkv, ko, kob = jax.random.split(key, 5)

    x = jax.random.normal(kx, (B, N, D), dtype=jnp.float32)
    params = {
        "ln_w": jnp.ones((1, D), jnp.float32),
        "ln_b": jnp.zeros((1, D), jnp.float32),
        "wq": 0.05 * jax.random.normal(kq, (D, inner), dtype=jnp.float32),
        "wkv": 0.05 * jax.random.normal(kkv, (D, 2 * inner), dtype=jnp.float32),
        "wo": 0.05 * jax.random.normal(ko, (inner, D), dtype=jnp.float32),
        "bo": 0.05 * jax.random.normal(kob, (1, D), dtype=jnp.float32),
    }

    ref = la_block_ref(x, params, heads=heads, dim_head=dim_head)

    # Full-precision MXU path (exact reciprocal): tight check.
    prep_f32 = prepare_la_block_params(params, heads=heads, dim_head=dim_head,
                                       seq_len=N, matmul_dtype=jnp.float32)
    run_f32 = jax.jit(functools.partial(la_block, heads=heads, dim_head=dim_head,
                                        matmul_dtype=jnp.float32))
    out_f32 = jax.block_until_ready(run_f32(x, prep_f32))
    assert out_f32.shape == (B, N, D)
    err_f32 = float(jnp.abs(out_f32 - ref).max())
    assert err_f32 < 5e-3, f"f32 path max abs err {err_f32}"

    # Default bf16-MXU path (f32 accumulation & statistics): looser check.
    prep_bf16 = prepare_la_block_params(params, heads=heads, dim_head=dim_head,
                                        seq_len=N)
    run_bf16 = jax.jit(functools.partial(la_block, heads=heads, dim_head=dim_head))
    out_bf16 = jax.block_until_ready(run_bf16(x, prep_bf16))
    assert out_bf16.shape == (B, N, D)
    err_bf16 = float(jnp.abs(out_bf16 - ref).max())
    assert err_bf16 < 3e-2, f"bf16 path max abs err {err_bf16}"

    print("KERNEL_OK")
</pallas_src>

<mosaic_0001>
module attributes {stable_mosaic.version = 11 : i64} {
  func.func @la_block_kernel(%arg0: i32, %arg1: memref<16x32xf32, #tpu.memory_space<vmem>>, %arg2: memref<32x96xf32, #tpu.memory_space<vmem>>, %arg3: memref<1x96xf32, #tpu.memory_space<vmem>>, %arg4: memref<32x32xf32, #tpu.memory_space<vmem>>, %arg5: memref<1x32xf32, #tpu.memory_space<vmem>>, %arg6: memref<32x32xf32, #tpu.memory_space<vmem>>, %arg7: memref<2x256xf32, #tpu.memory_space<vmem>>) attributes {dimension_semantics = [#tpu.dimension_semantics<parallel>], iteration_bounds = array<i64: 1>, scalar_prefetch = 0 : i64, scratch_operands = 0 : i64, tpu.core_type = #tpu.core_type<tc>, window_params = [{transform_indices = @transform_0, window_bounds = array<i64: 16, 32>}, {pipeline_mode = #tpu.pipeline_mode<synchronous>, transform_indices = @transform_1, window_bounds = array<i64: 32, 96>}, {pipeline_mode = #tpu.pipeline_mode<synchronous>, transform_indices = @transform_2, window_bounds = array<i64: 1, 96>}, {pipeline_mode = #tpu.pipeline_mode<synchronous>, transform_indices = @transform_3, window_bounds = array<i64: 32, 32>}, {pipeline_mode = #tpu.pipeline_mode<synchronous>, transform_indices = @transform_4, window_bounds = array<i64: 1, 32>}, {pipeline_mode = #tpu.pipeline_mode<synchronous>, transform_indices = @transform_5, window_bounds = array<i64: 32, 32>}, {transform_indices = @transform_6, window_bounds = array<i64: 2, 256>}]} {
    %c0 = arith.constant 0 : index
    %c0_0 = arith.constant 0 : index
    %0 = vector.load %arg1[%c0, %c0_0] : memref<16x32xf32, #tpu.memory_space<vmem>>, vector<16x32xf32>
    %cst = arith.constant dense<0.000000e+00> : vector<16xf32>
    %1 = vector.multi_reduction <add>, %0, %cst [1] : vector<16x32xf32> to vector<16xf32>
    %2 = vector.shape_cast %1 : vector<16xf32> to vector<16x1xf32>
    %cst_1 = arith.constant 3.200000e+01 : f32
    %3 = vector.broadcast %cst_1 : f32 to vector<16x1xf32>
    %4 = arith.divf %2, %3 : vector<16x1xf32>
    %5 = vector.broadcast %4 : vector<16x1xf32> to vector<16x32xf32>
    %6 = arith.subf %0, %5 : vector<16x32xf32>
    %7 = arith.mulf %6, %6 : vector<16x32xf32>
    %cst_2 = arith.constant dense<0.000000e+00> : vector<16xf32>
    %8 = vector.multi_reduction <add>, %7, %cst_2 [1] : vector<16x32xf32> to vector<16xf32>
    %9 = vector.shape_cast %8 : vector<16xf32> to vector<16x1xf32>
    %cst_3 = arith.constant 3.200000e+01 : f32
    %10 = vector.broadcast %cst_3 : f32 to vector<16x1xf32>
    %11 = arith.divf %9, %10 : vector<16x1xf32>
    %12 = vector.broadcast %4 : vector<16x1xf32> to vector<16x32xf32>
    %13 = arith.subf %0, %12 : vector<16x32xf32>
    %cst_4 = arith.constant 9.99999974E-6 : f32
    %14 = vector.broadcast %cst_4 : f32 to vector<16x1xf32>
    %15 = arith.addf %11, %14 : vector<16x1xf32>
    %16 = math.rsqrt %15 : vector<16x1xf32>
    %17 = vector.broadcast %16 : vector<16x1xf32> to vector<16x32xf32>
    %18 = arith.mulf %13, %17 : vector<16x32xf32>
    %c0_5 = arith.constant 0 : index
    %c0_6 = arith.constant 0 : index
    %19 = vector.load %arg2[%c0_5, %c0_6] : memref<32x96xf32, #tpu.memory_space<vmem>>, vector<32x96xf32>
    %cst_7 = arith.constant dense<0.000000e+00> : vector<16x96xf32>
    %20 = tpu.matmul %18, %19, %cst_7 {dimension_numbers = #tpu.dot_dimension_numbers<[1], [0], [0], [1], [0, 0, 1, 1], [], []>} : vector<16x32xf32>, vector<32x96xf32>, vector<16x96xf32> -> vector<16x96xf32>
    %c0_8 = arith.constant 0 : index
    %c0_9 = arith.constant 0 : index
    %21 = vector.load %arg3[%c0_8, %c0_9] : memref<1x96xf32, #tpu.memory_space<vmem>>, vector<1x96xf32>
    %22 = vector.broadcast %21 : vector<1x96xf32> to vector<16x96xf32>
    %23 = arith.addf %20, %22 : vector<16x96xf32>
    %24 = vector.extract_strided_slice %23 {offsets = [0, 0], sizes = [16, 32], strides = [1, 1]} : vector<16x96xf32> to vector<16x32xf32>
    %25 = vector.shape_cast %24 : vector<16x32xf32> to vector<2x8x32xf32>
    %26 = vector.extract_strided_slice %23 {offsets = [0, 32], sizes = [16, 32], strides = [1, 1]} : vector<16x96xf32> to vector<16x32xf32>
    %27 = vector.shape_cast %26 : vector<16x32xf32> to vector<2x8x32xf32>
    %28 = vector.extract_strided_slice %23 {offsets = [0, 64], sizes = [16, 32], strides = [1, 1]} : vector<16x96xf32> to vector<16x32xf32>
    %29 = vector.shape_cast %28 : vector<16x32xf32> to vector<2x8x32xf32>
    %c0_10 = arith.constant 0 : index
    %c0_11 = arith.constant 0 : index
    %30 = vector.load %arg6[%c0_10, %c0_11] : memref<32x32xf32, #tpu.memory_space<vmem>>, vector<32x32xf32>
    %31 = tpu.concatenate %27, %27, %27, %27 in 1 : vector<2x8x32xf32>, vector<2x8x32xf32>, vector<2x8x32xf32>, vector<2x8x32xf32> -> vector<2x32x32xf32>
    %32 = vector.shape_cast %30 : vector<32x32xf32> to vector<1x32x32xf32>
    %33 = vector.broadcast %32 : vector<1x32x32xf32> to vector<2x32x32xf32>
    %34 = arith.mulf %31, %33 : vector<2x32x32xf32>
    %35 = tpu.concatenate %29, %29, %29, %29 in 1 : vector<2x8x32xf32>, vector<2x8x32xf32>, vector<2x8x32xf32>, vector<2x8x32xf32> -> vector<2x32x32xf32>
    %36 = vector.shape_cast %30 : vector<32x32xf32> to vector<1x32x32xf32>
    %37 = vector.broadcast %36 : vector<1x32x32xf32> to vector<2x32x32xf32>
    %38 = arith.mulf %35, %37 : vector<2x32x32xf32>
    %39 = vector.shape_cast %30 : vector<32x32xf32> to vector<1x32x32xf32>
    %40 = vector.broadcast %39 : vector<1x32x32xf32> to vector<2x32x32xf32>
    %41 = tpu.concatenate %38, %40 in 2 : vector<2x32x32xf32>, vector<2x32x32xf32> -> vector<2x32x64xf32>
    "tpu.trace_start"() <{level = 10 : i32, message = "bic,brc->bir"}> : () -> ()
    %cst_12 = arith.constant dense<0.000000e+00> : vector<2x8x32xf32>
    %42 = tpu.matmul %25, %34, %cst_12 {dimension_numbers = #tpu.dot_dimension_numbers<[2], [2], [1], [1], [0, 0, 0, 1, 1, 1], [0], [0]>} : vector<2x8x32xf32>, vector<2x32x32xf32>, vector<2x8x32xf32> -> vector<2x8x32xf32>
    "tpu.trace_stop"() : () -> ()
    %cst_13 = arith.constant dense<0xFF800000> : vector<2x8xf32>
    %43 = vector.multi_reduction <maximumf>, %42, %cst_13 [2] : vector<2x8x32xf32> to vector<2x8xf32>
    %44 = vector.shape_cast %43 : vector<2x8xf32> to vector<2x8x1xf32>
    %45 = vector.broadcast %44 : vector<2x8x1xf32> to vector<2x8x32xf32>
    %46 = arith.subf %42, %45 : vector<2x8x32xf32>
    %47 = math.exp %46 : vector<2x8x32xf32>
    "tpu.trace_start"() <{level = 10 : i32, message = "bir,brc->bic"}> : () -> ()
    %cst_14 = arith.constant dense<0.000000e+00> : vector<2x8x64xf32>
    %48 = tpu.matmul %47, %41, %cst_14 {dimension_numbers = #tpu.dot_dimension_numbers<[2], [1], [1], [2], [0, 0, 0, 1, 1, 2], [0], [0]>} : vector<2x8x32xf32>, vector<2x32x64xf32>, vector<2x8x64xf32> -> vector<2x8x64xf32>
    "tpu.trace_stop"() : () -> ()
    %49 = vector.extract_strided_slice %48 {offsets = [0, 0, 0], sizes = [2, 8, 32], strides = [1, 1, 1]} : vector<2x8x64xf32> to vector<2x8x32xf32>
    %50 = vector.extract_strided_slice %48 {offsets = [0, 0, 32], sizes = [2, 8, 32], strides = [1, 1, 1]} : vector<2x8x64xf32> to vector<2x8x32xf32>
    %51 = tpu.reciprocal %50 : vector<2x8x32xf32> -> vector<2x8x32xf32>
    %52 = arith.mulf %49, %51 : vector<2x8x32xf32>
    %53 = vector.shape_cast %52 : vector<2x8x32xf32> to vector<16x32xf32>
    %c0_15 = arith.constant 0 : index
    %c0_16 = arith.constant 0 : index
    %54 = vector.load %arg4[%c0_15, %c0_16] : memref<32x32xf32, #tpu.memory_space<vmem>>, vector<32x32xf32>
    %cst_17 = arith.constant dense<0.000000e+00> : vector<16x32xf32>
    %55 = tpu.matmul %53, %54, %cst_17 {dimension_numbers = #tpu.dot_dimension_numbers<[1], [0], [0], [1], [0, 0, 1, 1], [], []>} : vector<16x32xf32>, vector<32x32xf32>, vector<16x32xf32> -> vector<16x32xf32>
    %c0_18 = arith.constant 0 : index
    %c0_19 = arith.constant 0 : index
    %56 = vector.load %arg5[%c0_18, %c0_19] : memref<1x32xf32, #tpu.memory_space<vmem>>, vector<1x32xf32>
    %57 = vector.broadcast %56 : vector<1x32xf32> to vector<16x32xf32>
    %58 = arith.addf %55, %57 : vector<16x32xf32>
    %c0_20 = arith.constant 0 : index
    %c0_21 = arith.constant 0 : index
    %59 = vector.load %arg1[%c0_20, %c0_21] : memref<16x32xf32, #tpu.memory_space<vmem>>, vector<16x32xf32>
    %60 = arith.addf %58, %59 : vector<16x32xf32>
    %61 = vector.shape_cast %60 : vector<16x32xf32> to vector<2x8x32xf32>
    %62 = vector.extract_strided_slice %61 {offsets = [0, 0, 0], sizes = [2, 1, 32], strides = [1, 1, 1]} : vector<2x8x32xf32> to vector<2x1x32xf32>
    %63 = vector.shape_cast %62 : vector<2x1x32xf32> to vector<2x32xf32>
    %64 = vector.extract_strided_slice %61 {offsets = [0, 1, 0], sizes = [2, 1, 32], strides = [1, 1, 1]} : vector<2x8x32xf32> to vector<2x1x32xf32>
    %65 = vector.shape_cast %64 : vector<2x1x32xf32> to vector<2x32xf32>
    %66 = vector.extract_strided_slice %61 {offsets = [0, 2, 0], sizes = [2, 1, 32], strides = [1, 1, 1]} : vector<2x8x32xf32> to vector<2x1x32xf32>
    %67 = vector.shape_cast %66 : vector<2x1x32xf32> to vector<2x32xf32>
    %68 = vector.extract_strided_slice %61 {offsets = [0, 3, 0], sizes = [2, 1, 32], strides = [1, 1, 1]} : vector<2x8x32xf32> to vector<2x1x32xf32>
    %69 = vector.shape_cast %68 : vector<2x1x32xf32> to vector<2x32xf32>
    %70 = vector.extract_strided_slice %61 {offsets = [0, 4, 0], sizes = [2, 1, 32], strides = [1, 1, 1]} : vector<2x8x32xf32> to vector<2x1x32xf32>
    %71 = vector.shape_cast %70 : vector<2x1x32xf32> to vector<2x32xf32>
    %72 = vector.extract_strided_slice %61 {offsets = [0, 5, 0], sizes = [2, 1, 32], strides = [1, 1, 1]} : vector<2x8x32xf32> to vector<2x1x32xf32>
    %73 = vector.shape_cast %72 : vector<2x1x32xf32> to vector<2x32xf32>
    %74 = vector.extract_strided_slice %61 {offsets = [0, 6, 0], sizes = [2, 1, 32], strides = [1, 1, 1]} : vector<2x8x32xf32> to vector<2x1x32xf32>
    %75 = vector.shape_cast %74 : vector<2x1x32xf32> to vector<2x32xf32>
    %76 = vector.extract_strided_slice %61 {offsets = [0, 7, 0], sizes = [2, 1, 32], strides = [1, 1, 1]} : vector<2x8x32xf32> to vector<2x1x32xf32>
    %77 = vector.shape_cast %76 : vector<2x1x32xf32> to vector<2x32xf32>
    %78 = tpu.concatenate %63, %65, %67, %69, %71, %73, %75, %77 in 1 : vector<2x32xf32>, vector<2x32xf32>, vector<2x32xf32>, vector<2x32xf32>, vector<2x32xf32>, vector<2x32xf32>, vector<2x32xf32>, vector<2x32xf32> -> vector<2x256xf32>
    %c0_22 = arith.constant 0 : index
    %c0_23 = arith.constant 0 : index
    %79 = vector.load %arg7[%c0_22, %c0_23] : memref<2x256xf32, #tpu.memory_space<vmem>>, vector<2x256xf32>
    tpu.vector_store %arg7[%c0_22, %c0_23], %78 {strides = array<i32>} : memref<2x256xf32, #tpu.memory_space<vmem>>, vector<2x256xf32>,
    return
  }
  func.func @transform_0(%arg0: i32) -> (i32, i32) {
    %c0_i32 = arith.constant 0 : i32
    %c0_i32_0 = arith.constant 0 : i32
    return %arg0, %c0_i32 : i32, i32
  }
  func.func @transform_1(%arg0: i32) -> (i32, i32) {
    %c0_i32 = arith.constant 0 : i32
    %c0_i32_0 = arith.constant 0 : i32
    %c0_i32_1 = arith.constant 0 : i32
    return %c0_i32, %c0_i32_0 : i32, i32
  }
  func.func @transform_2(%arg0: i32) -> (i32, i32) {
    %c0_i32 = arith.constant 0 : i32
    %c0_i32_0 = arith.constant 0 : i32
    %c0_i32_1 = arith.constant 0 : i32
    return %c0_i32, %c0_i32_0 : i32, i32
  }
  func.func @transform_3(%arg0: i32) -> (i32, i32) {
    %c0_i32 = arith.constant 0 : i32
    %c0_i32_0 = arith.constant 0 : i32
    %c0_i32_1 = arith.constant 0 : i32
    return %c0_i32, %c0_i32_0 : i32, i32
  }
  func.func @transform_4(%arg0: i32) -> (i32, i32) {
    %c0_i32 = arith.constant 0 : i32
    %c0_i32_0 = arith.constant 0 : i32
    %c0_i32_1 = arith.constant 0 : i32
    return %c0_i32, %c0_i32_0 : i32, i32
  }
  func.func @transform_5(%arg0: i32) -> (i32, i32) {
    %c0_i32 = arith.constant 0 : i32
    %c0_i32_0 = arith.constant 0 : i32
    %c0_i32_1 = arith.constant 0 : i32
    return %c0_i32, %c0_i32_0 : i32, i32
  }
  func.func @transform_6(%arg0: i32) -> (i32, i32) {
    %c0_i32 = arith.constant 0 : i32
    %c0_i32_0 = arith.constant 0 : i32
    return %arg0, %c0_i32 : i32, i32
  }
}

</mosaic_0001>

<llo_original>
// kernel: la_block.1
$region0: #{la_block.1}
  #allocation0 [shape = 'u32[]', space=smem, size = 0x4, offset = 0x4, fixed_abs, tag = 'smem constant byte address 0x4 - core index']
  #allocation1 [shape = 'u32[144,128]{1,0:T(1,128)}', space=vmem, size = 0x12000, scoped, tag = 'internal scratch']
  %s0 = inlined_call_operand.hbm [shape: f32[16,32], index: 0, kind: input, shape index: {}]
  %s1 = inlined_call_operand.hbm [shape: f32[32,96], index: 1, kind: input, shape index: {}]
  %s2 = inlined_call_operand.vmem [shape: f32[1,96], index: 2, kind: input, shape index: {}]
  %s3 = inlined_call_operand.hbm [shape: f32[32,32], index: 3, kind: input, shape index: {}]
  %s4 = inlined_call_operand.vmem [shape: f32[1,32], index: 4, kind: input, shape index: {}]
  %s5 = inlined_call_operand.hbm [shape: f32[32,32], index: 5, kind: input, shape index: {}]
  %s6 = inlined_call_operand.vmem [shape: f32[2,256], index: 6, kind: output, shape index: {}]
  %s7 = sld [smem:[#allocation0]]
  $region50: #{la_block.1} parent=0
    _
  %s9 = ssub.s32 1, %s7
  %s10 = scalar_select 0, %s9, %s7
  $region1: #{la_block.1} parent=0
    #allocation2 [shape = 'u8[8192]{0}', space=vmem, size = 0x2000, scoped, tag = 'input window, operand 0, single buffered']
    #allocation3 [shape = 's32[1]{0}', space=sflag, size = 0x4, scoped, tag = 'scoped memory for la_block.1']
    #allocation4 [shape = 'u8[16384]{0}', space=vmem, size = 0x4000, scoped, tag = 'input window, operand 1, single buffered']
    #allocation5 [shape = 's32[1]{0}', space=sflag, size = 0x4, scoped, tag = 'scoped memory for la_block.1']
    #allocation6 [shape = 'u8[16384]{0}', space=vmem, size = 0x4000, scoped, tag = 'input window, operand 3, single buffered']
    #allocation7 [shape = 'u8[16384]{0}', space=vmem, size = 0x4000, scoped, tag = 'input window, operand 5, single buffered']
    #allocation8 [shape = 's32[1]{0}', space=sflag, size = 0x4, scoped, tag = 'scoped memory for la_block.1']
    %11 = vsyncpa [#allocation3], 0
    %12 = vsyncpa [#allocation5], 0
    %13 = vsyncpa [#allocation8], 0
    // Predicated region
    $region2: #{la_block.1} parent=1 // pred_check
      _
    $region3: #{la_block.1} parent=1 // pred_check_branch
      %15 = sbr.rel (0) target = $region5
    $region4: #{la_block.1} parent=1 // pred_region
      %s17 = ssub.s32 256, 256
      %18 = vsyncadd [#allocation3], %s17
      %s19 = sshll.u32 [#allocation2], 4
      %s20 = int_to_ptr.vmem [resolvable:$true] %s19
      %25 = dma.hbm_to_vmem [thread:$0]  %s0, 256, %s20, [#allocation3], 128, 128, 8
    $region5: #{la_block.1} parent=1 // pred_fallthru
      _
    // Predicated region
    $region6: #{la_block.1} parent=1 // pred_check
      _
    $region7: #{la_block.1} parent=1 // pred_check_branch
      %27 = sbr.rel (0) target = $region9
    $region8: #{la_block.1} parent=1 // pred_region
      %s29 = ssub.s32 512, 512
      %30 = vsyncadd [#allocation5], %s29
      %s31 = sshll.u32 [#allocation4], 4
      %s32 = int_to_ptr.vmem [resolvable:$true] %s31
      %37 = dma.hbm_to_vmem [thread:$0]  %s1, 512, %s32, [#allocation5], 128, 128, 8
    $region9: #{la_block.1} parent=1 // pred_fallthru
      _
    // Predicated region
    $region10: #{la_block.1} parent=1 // pred_check
      _
    $region11: #{la_block.1} parent=1 // pred_check_branch
      %39 = sbr.rel (0) target = $region13
    $region12: #{la_block.1} parent=1 // pred_region
      _
    $region13: #{la_block.1} parent=1 // pred_fallthru
      _
    // Predicated region
    $region14: #{la_block.1} parent=1 // pred_check
      _
    $region15: #{la_block.1} parent=1 // pred_check_branch
      %41 = sbr.rel (0) target = $region17
    $region16: #{la_block.1} parent=1 // pred_region
      %s43 = ssub.s32 512, 512
      %44 = vsyncadd [#allocation5], %s43
      %s45 = sshll.u32 [#allocation6], 4
      %s46 = int_to_ptr.vmem [resolvable:$true] %s45
      %51 = dma.hbm_to_vmem [thread:$0]  %s3, 512, %s46, [#allocation5], 128, 128, 8
    $region17: #{la_block.1} parent=1 // pred_fallthru
      _
    // Predicated region
    $region18: #{la_block.1} parent=1 // pred_check
      _
    $region19: #{la_block.1} parent=1 // pred_check_branch
      %53 = sbr.rel (0) target = $region21
    $region20: #{la_block.1} parent=1 // pred_region
      _
    $region21: #{la_block.1} parent=1 // pred_fallthru
      _
    // Predicated region
    $region22: #{la_block.1} parent=1 // pred_check
      _
    $region23: #{la_block.1} parent=1 // pred_check_branch
      %55 = sbr.rel (0) target = $region25
    $region24: #{la_block.1} parent=1 // pred_region
      %s57 = ssub.s32 512, 512
      %58 = vsyncadd [#allocation8], %s57
      %s59 = sshll.u32 [#allocation7], 4
      %s60 = int_to_ptr.vmem [resolvable:$true] %s59
      %65 = dma.hbm_to_vmem [thread:$0]  %s5, 512, %s60, [#allocation8], 128, 128, 8
    $region25: #{la_block.1} parent=1 // pred_fallthru
      _
    // Predicated region
    $region26: #{la_block.1} parent=1 // pred_check
      _
    $region27: #{la_block.1} parent=1 // pred_check_branch
      %67 = sbr.rel (0) target = $region29
    $region28: #{la_block.1} parent=1 // pred_region
      %68 = dma.done [#allocation3], 256
    $region29: #{la_block.1} parent=1 // pred_fallthru
      _
    // Predicated region
    $region30: #{la_block.1} parent=1 // pred_check
      _
    $region31: #{la_block.1} parent=1 // pred_check_branch
      %70 = sbr.rel (0) target = $region33
    $region32: #{la_block.1} parent=1 // pred_region
      %71 = dma.done [#allocation5], 512
    $region33: #{la_block.1} parent=1 // pred_fallthru
      _
    // Predicated region
    $region34: #{la_block.1} parent=1 // pred_check
      _
    $region35: #{la_block.1} parent=1 // pred_check_branch
      %73 = sbr.rel (0) target = $region37
    $region36: #{la_block.1} parent=1 // pred_region
      %74 = dma.done [#allocation5], 512
    $region37: #{la_block.1} parent=1 // pred_fallthru
      _
    // Predicated region
    $region38: #{la_block.1} parent=1 // pred_check
      _
    $region39: #{la_block.1} parent=1 // pred_check_branch
      %76 = sbr.rel (0) target = $region41
    $region40: #{la_block.1} parent=1 // pred_region
      %77 = dma.done [#allocation8], 512
    $region41: #{la_block.1} parent=1 // pred_fallthru
      _
    %v78 = vld [vmem:[#allocation2] sm:$0xff]
    %v79 = vld [vmem:[#allocation2 + $0x8] sm:$0xff]
    %vm80 = vcmask 261120
    %v81 = vsel %vm80, %v78, 0.0
    %82 = vadd.xlane.f32.xlu0 %v81
    %v83 = vpop.xlane.xlu0 %82
    %v84 = vsel %vm80, %v79, 0.0
    %85 = vadd.xlane.f32.xlu0 %v84
    %v86 = vpop.xlane.xlu0 %85
    %v87 = vrcp.pop 32.0
    %v88 = vmul.f32 %v83, %v87
    %v89 = vmul.f32 %v86, %v87
    %v90 = vsub.f32 %v78, %v88
    %v91 = vsub.f32 %v79, %v89
    %v92 = vmul.f32 %v90, %v90
    %v93 = vmul.f32 %v91, %v91
    %v94 = vsel %vm80, %v92, 0.0
    %95 = vadd.xlane.f32.xlu0 %v94
    %v96 = vpop.xlane.xlu0 %95
    %v97 = vsel %vm80, %v93, 0.0
    %98 = vadd.xlane.f32.xlu0 %v97
    %v99 = vpop.xlane.xlu0 %98
    %v100 = vmul.f32 %v96, %v87
    %v101 = vmul.f32 %v99, %v87
    %v102 = vadd.f32 %v100, 1e-05
    %v103 = vadd.f32 %v101, 1e-05
    %v104 = vrsqrt.pop %v102
    %v105 = vrsqrt.pop %v103
    %v106 = vmul.f32 %v90, %v104
    %v107 = vmul.f32 %v91, %v105
    %v108 = vld [vmem:[#allocation4] sm:$0xff]
    %v109 = vld [vmem:[#allocation4 + $0x8] sm:$0xff]
    %v110 = vld [vmem:[#allocation4 + $0x10] sm:$0xff]
    %v111 = vld [vmem:[#allocation4 + $0x18] sm:$0xff]
    %v112 = vld [vmem:[%s2] sm:$0x1]
    %v114 = vlaneseq
    %v115 = vshrl.u32 %v114, 7
    %v116 = vsub.s32 0, %v115
    %v117 = vrot.slane %v112, %v116
    %v120 = vsel %vm80, %v106, 0
    %v123 = vsel %vm80, %v107, 0
    %125 = vmatprep.subr.mxu0 0.0
    %126 = vmatpush1.msra.mxu0 %v108
    %127 = vmatprep.subr.mxu0 0.0
    %128 = vmatpush1.msra.mxu0 %v109
    %129 = vmatprep.subr.mxu0 0.0
    %130 = vmatpush1.msra.mxu0 %v110
    %131 = vmatprep.subr.mxu0 0.0
    %132 = vmatpush1.msra.mxu0 %v111
    %133 = vmatprep.subr.mxu0 0.0
    %134 = vmatpush1.msra.mxu0 0.0
    %135 = vmatprep.subr.mxu0 0.0
    %136 = vmatpush1.msra.mxu0 0.0
    %137 = vmatprep.subr.mxu0 0.0
    %138 = vmatpush1.msra.mxu0 0.0
    %139 = vmatprep.subr.mxu0 0.0
    %140 = vmatpush1.msra.mxu0 0.0
    %141 = vmatprep.subr.mxu0 0.0
    %142 = vmatpush1.msra.mxu0 0.0
    %143 = vmatprep.subr.mxu0 0.0
    %144 = vmatpush1.msra.mxu0 0.0
    %145 = vmatprep.subr.mxu0 0.0
    %146 = vmatpush1.msra.mxu0 0.0
    %147 = vmatprep.subr.mxu0 0.0
    %148 = vmatpush1.msra.mxu0 0.0
    %149 = vmatprep.subr.mxu0 0.0
    %150 = vmatpush1.msra.mxu0 0.0
    %151 = vmatprep.subr.mxu0 0.0
    %152 = vmatpush1.msra.mxu0 0.0
    %153 = vmatprep.subr.mxu0 0.0
    %154 = vmatpush1.msra.mxu0 0.0
    %155 = vmatprep.subr.mxu0 0.0
    %156 = vmatpush1.msra.mxu0 0.0
    %157 = vmatprep.subr.mxu0 0.0
    %158 = vmatpush1.msra.mxu0 0.0
    %159 = vmatprep.subr.mxu0 0.0
    %160 = vmatpush1.msra.mxu0 0.0
    %161 = vmatprep.subr.mxu0 0.0
    %162 = vmatpush1.msra.mxu0 0.0
    %163 = vmatprep.subr.mxu0 0.0
    %164 = vmatpush1.msra.mxu0 0.0
    %165 = vmatprep.subr.mxu0 0.0
    %166 = vmatpush1.msra.mxu0 0.0
    %167 = vmatprep.subr.mxu0 0.0
    %168 = vmatpush1.msra.mxu0 0.0
    %169 = vmatprep.subr.mxu0 0.0
    %170 = vmatpush1.msra.mxu0 0.0
    %171 = vmatprep.subr.mxu0 0.0
    %172 = vmatpush1.msra.mxu0 0.0
    %173 = vmatprep.subr.mxu0 0.0
    %174 = vmatpush1.msra.mxu0 0.0
    %175 = vmatprep.subr.mxu0 0.0
    %176 = vmatpush1.msra.mxu0 0.0
    %177 = vmatprep.subr.mxu0 0.0
    %178 = vmatpush1.msra.mxu0 0.0
    %179 = vmatprep.subr.mxu0 0.0
    %180 = vmatpush1.msra.mxu0 0.0
    %181 = vmatprep.subr.mxu0 0.0
    %182 = vmatpush1.msra.mxu0 0.0
    %183 = vmatprep.subr.mxu0 0.0
    %184 = vmatpush1.msra.mxu0 0.0
    %185 = vmatprep.subr.mxu0 0.0
    %186 = vmatpush1.msra.mxu0 0.0
    %187 = vmatprep.subr.mxu0 0.0
    %188 = vmatpush1.msra.mxu0 0.0
    %189 = vmatprep.mubr.f32.mxu0 0.0
    %190 = vmatmul.mubr.f32.gmra.mrb[0].mxu0 %v120
    %v191 = vpop.f32.mrb[0].mxu0
    %v192 = vadd.f32 %v117, %v191
    %v193 = vpop.f32.mrb[0].mxu0
    %194 = vmatprep.mubr.f32.mxu0 0.0
    %195 = vmatmul.mubr.f32.gmra.mrb[0].mxu0 %v123
    %v196 = vpop.f32.mrb[0].mxu0
    %v197 = vadd.f32 %v117, %v196
    %v198 = vpop.f32.mrb[0].mxu0
    %199 = vdwg.mxu0
    %v200 = vld [vmem:[#allocation7] sm:$0xff]
    %v201 = vld [vmem:[#allocation7 + $0x8] sm:$0xff]
    %v202 = vld [vmem:[#allocation7 + $0x10] sm:$0xff]
    %v203 = vld [vmem:[#allocation7 + $0x18] sm:$0xff]
    %208 = vrot.lane.b32.xlu0 %v200, 32
    %v209 = vpop.permute.xlu0 %208
    %210 = vrot.lane.b32.xlu0 %v201, 32
    %v211 = vpop.permute.xlu0 %210
    %212 = vrot.lane.b32.xlu0 %v202, 32
    %v213 = vpop.permute.xlu0 %212
    %214 = vrot.lane.b32.xlu0 %v203, 32
    %v215 = vpop.permute.xlu0 %214
    %v220 = vmul.f32 %v192, %v209
    %v221 = vmul.f32 %v192, %v211
    %v222 = vmul.f32 %v192, %v213
    %v223 = vmul.f32 %v192, %v215
    %v224 = vmul.f32 %v197, %v209
    %v225 = vmul.f32 %v197, %v211
    %v226 = vmul.f32 %v197, %v213
    %v227 = vmul.f32 %v197, %v215
    %228 = vrot.lane.b32.xlu0 %v200, 64
    %v229 = vpop.permute.xlu0 %228
    %230 = vrot.lane.b32.xlu0 %v201, 64
    %v231 = vpop.permute.xlu0 %230
    %232 = vrot.lane.b32.xlu0 %v202, 64
    %v233 = vpop.permute.xlu0 %232
    %234 = vrot.lane.b32.xlu0 %v203, 64
    %v235 = vpop.permute.xlu0 %234
    %v240 = vmul.f32 %v192, %v229
    %v241 = vmul.f32 %v192, %v231
    %v242 = vmul.f32 %v192, %v233
    %v243 = vmul.f32 %v192, %v235
    %v244 = vmul.f32 %v197, %v229
    %v245 = vmul.f32 %v197, %v231
    %v246 = vmul.f32 %v197, %v233
    %v247 = vmul.f32 %v197, %v235
    %256 = vrot.lane.b32.xlu0 %v240, 64
    %v257 = vpop.permute.xlu0 %256
    %258 = vrot.lane.b32.xlu0 %v241, 64
    %v259 = vpop.permute.xlu0 %258
    %260 = vrot.lane.b32.xlu0 %v242, 64
    %v261 = vpop.permute.xlu0 %260
    %262 = vrot.lane.b32.xlu0 %v243, 64
    %v263 = vpop.permute.xlu0 %262
    %264 = vrot.lane.b32.xlu0 %v244, 64
    %v265 = vpop.permute.xlu0 %264
    %266 = vrot.lane.b32.xlu0 %v245, 64
    %v267 = vpop.permute.xlu0 %266
    %268 = vrot.lane.b32.xlu0 %v246, 64
    %v269 = vpop.permute.xlu0 %268
    %270 = vrot.lane.b32.xlu0 %v247, 64
    %v271 = vpop.permute.xlu0 %270
    %v280 = vsel %vm80, %v257, %v209
    %v281 = vsel %vm80, %v259, %v211
    %v282 = vsel %vm80, %v261, %v213
    %v283 = vsel %vm80, %v263, %v215
    %v284 = vsel %vm80, %v265, %v209
    %v285 = vsel %vm80, %v267, %v211
    %v286 = vsel %vm80, %v269, %v213
    %v287 = vsel %vm80, %v271, %v215
    %292 = vrot.lane.b32.xlu0 %v220, 96
    %v293 = vpop.permute.xlu0 %292
    %294 = vrot.lane.b32.xlu0 %v221, 96
    %v295 = vpop.permute.xlu0 %294
    %296 = vrot.lane.b32.xlu0 %v222, 96
    %v297 = vpop.permute.xlu0 %296
    %298 = vrot.lane.b32.xlu0 %v223, 96
    %v299 = vpop.permute.xlu0 %298
    %v301 = vsel %vm80, %v192, 0
    %v303 = vsel %vm80, %v293, 0
    %v305 = vsel %vm80, %v295, 0
    %v307 = vsel %vm80, %v297, 0
    %v309 = vsel %vm80, %v299, 0
    %311 = vmatprep.subr.mxu0 0.0
    %312 = vmatpush1.xpose.msra.mxu0 %v303
    %313 = vmatprep.subr.mxu0 0.0
    %314 = vmatpush1.xpose.msra.mxu0 %v305
    %315 = vmatprep.subr.mxu0 0.0
    %316 = vmatpush1.xpose.msra.mxu0 %v307
    %317 = vmatprep.subr.mxu0 0.0
    %318 = vmatpush1.xpose.msra.mxu0 %v309
    %319 = vmatprep.subr.mxu0 0.0
    %320 = vmatpush1.xpose.msra.mxu0 0.0
    %321 = vmatprep.subr.mxu0 0.0
    %322 = vmatpush1.xpose.msra.mxu0 0.0
    %323 = vmatprep.subr.mxu0 0.0
    %324 = vmatpush1.xpose.msra.mxu0 0.0
    %325 = vmatprep.subr.mxu0 0.0
    %326 = vmatpush1.xpose.msra.mxu0 0.0
    %327 = vmatprep.subr.mxu0 0.0
    %328 = vmatpush1.xpose.msra.mxu0 0.0
    %329 = vmatprep.subr.mxu0 0.0
    %330 = vmatpush1.xpose.msra.mxu0 0.0
    %331 = vmatprep.subr.mxu0 0.0
    %332 = vmatpush1.xpose.msra.mxu0 0.0
    %333 = vmatprep.subr.mxu0 0.0
    %334 = vmatpush1.xpose.msra.mxu0 0.0
    %335 = vmatprep.subr.mxu0 0.0
    %336 = vmatpush1.xpose.msra.mxu0 0.0
    %337 = vmatprep.subr.mxu0 0.0
    %338 = vmatpush1.xpose.msra.mxu0 0.0
    %339 = vmatprep.subr.mxu0 0.0
    %340 = vmatpush1.xpose.msra.mxu0 0.0
    %341 = vmatprep.subr.mxu0 0.0
    %342 = vmatpush1.xpose.msra.mxu0 0.0
    %343 = vmatprep.subr.mxu0 0.0
    %344 = vmatpush1.xpose.msra.mxu0 0.0
    %345 = vmatprep.subr.mxu0 0.0
    %346 = vmatpush1.xpose.msra.mxu0 0.0
    %347 = vmatprep.subr.mxu0 0.0
    %348 = vmatpush1.xpose.msra.mxu0 0.0
    %349 = vmatprep.subr.mxu0 0.0
    %350 = vmatpush1.xpose.msra.mxu0 0.0
    %351 = vmatprep.subr.mxu0 0.0
    %352 = vmatpush1.xpose.msra.mxu0 0.0
    %353 = vmatprep.subr.mxu0 0.0
    %354 = vmatpush1.xpose.msra.mxu0 0.0
    %355 = vmatprep.subr.mxu0 0.0
    %356 = vmatpush1.xpose.msra.mxu0 0.0
    %357 = vmatprep.subr.mxu0 0.0
    %358 = vmatpush1.xpose.msra.mxu0 0.0
    %359 = vmatprep.subr.mxu0 0.0
    %360 = vmatpush1.xpose.msra.mxu0 0.0
    %361 = vmatprep.subr.mxu0 0.0
    %362 = vmatpush1.xpose.msra.mxu0 0.0
    %363 = vmatprep.subr.mxu0 0.0
    %364 = vmatpush1.xpose.msra.mxu0 0.0
    %365 = vmatprep.subr.mxu0 0.0
    %366 = vmatpush1.xpose.msra.mxu0 0.0
    %367 = vmatprep.subr.mxu0 0.0
    %368 = vmatpush1.xpose.msra.mxu0 0.0
    %369 = vmatprep.subr.mxu0 0.0
    %370 = vmatpush1.xpose.msra.mxu0 0.0
    %371 = vmatprep.subr.mxu0 0.0
    %372 = vmatpush1.xpose.msra.mxu0 0.0
    %373 = vmatprep.subr.mxu0 0.0
    %374 = vmatpush1.xpose.msra.mxu0 0.0
    %375 = vmatprep.mubr.f32.mxu0 0.0
    %376 = vmatmul.mubr.f32.gmra.mrb[0].mxu0 %v301
    %v377 = vpop.f32.mrb[0].mxu0
    %v378 = vadd.f32 0.0, %v377
    %v379 = vpop.f32.mrb[0].mxu0
    %380 = vdwg.mxu0
    %385 = vrot.lane.b32.xlu0 %v224, 96
    %v386 = vpop.permute.xlu0 %385
    %387 = vrot.lane.b32.xlu0 %v225, 96
    %v388 = vpop.permute.xlu0 %387
    %389 = vrot.lane.b32.xlu0 %v226, 96
    %v390 = vpop.permute.xlu0 %389
    %391 = vrot.lane.b32.xlu0 %v227, 96
    %v392 = vpop.permute.xlu0 %391
    %v394 = vsel %vm80, %v197, 0
    %v396 = vsel %vm80, %v386, 0
    %v398 = vsel %vm80, %v388, 0
    %v400 = vsel %vm80, %v390, 0
    %v402 = vsel %vm80, %v392, 0
    %404 = vmatprep.subr.mxu0 0.0
    %405 = vmatpush1.xpose.msra.mxu0 %v396
    %406 = vmatprep.subr.mxu0 0.0
    %407 = vmatpush1.xpose.msra.mxu0 %v398
    %408 = vmatprep.subr.mxu0 0.0
    %409 = vmatpush1.xpose.msra.mxu0 %v400
    %410 = vmatprep.subr.mxu0 0.0
    %411 = vmatpush1.xpose.msra.mxu0 %v402
    %412 = vmatprep.subr.mxu0 0.0
    %413 = vmatpush1.xpose.msra.mxu0 0.0
    %414 = vmatprep.subr.mxu0 0.0
    %415 = vmatpush1.xpose.msra.mxu0 0.0
    %416 = vmatprep.subr.mxu0 0.0
    %417 = vmatpush1.xpose.msra.mxu0 0.0
    %418 = vmatprep.subr.mxu0 0.0
    %419 = vmatpush1.xpose.msra.mxu0 0.0
    %420 = vmatprep.subr.mxu0 0.0
    %421 = vmatpush1.xpose.msra.mxu0 0.0
    %422 = vmatprep.subr.mxu0 0.0
    %423 = vmatpush1.xpose.msra.mxu0 0.0
    %424 = vmatprep.subr.mxu0 0.0
    %425 = vmatpush1.xpose.msra.mxu0 0.0
    %426 = vmatprep.subr.mxu0 0.0
    %427 = vmatpush1.xpose.msra.mxu0 0.0
    %428 = vmatprep.subr.mxu0 0.0
    %429 = vmatpush1.xpose.msra.mxu0 0.0
    %430 = vmatprep.subr.mxu0 0.0
    %431 = vmatpush1.xpose.msra.mxu0 0.0
    %432 = vmatprep.subr.mxu0 0.0
    %433 = vmatpush1.xpose.msra.mxu0 0.0
    %434 = vmatprep.subr.mxu0 0.0
    %435 = vmatpush1.xpose.msra.mxu0 0.0
    %436 = vmatprep.subr.mxu0 0.0
    %437 = vmatpush1.xpose.msra.mxu0 0.0
    %438 = vmatprep.subr.mxu0 0.0
    %439 = vmatpush1.xpose.msra.mxu0 0.0
    %440 = vmatprep.subr.mxu0 0.0
    %441 = vmatpush1.xpose.msra.mxu0 0.0
    %442 = vmatprep.subr.mxu0 0.0
    %443 = vmatpush1.xpose.msra.mxu0 0.0
    %444 = vmatprep.subr.mxu0 0.0
    %445 = vmatpush1.xpose.msra.mxu0 0.0
    %446 = vmatprep.subr.mxu0 0.0
    %447 = vmatpush1.xpose.msra.mxu0 0.0
    %448 = vmatprep.subr.mxu0 0.0
    %449 = vmatpush1.xpose.msra.mxu0 0.0
    %450 = vmatprep.subr.mxu0 0.0
    %451 = vmatpush1.xpose.msra.mxu0 0.0
    %452 = vmatprep.subr.mxu0 0.0
    %453 = vmatpush1.xpose.msra.mxu0 0.0
    %454 = vmatprep.subr.mxu0 0.0
    %455 = vmatpush1.xpose.msra.mxu0 0.0
    %456 = vmatprep.subr.mxu0 0.0
    %457 = vmatpush1.xpose.msra.mxu0 0.0
    %458 = vmatprep.subr.mxu0 0.0
    %459 = vmatpush1.xpose.msra.mxu0 0.0
    %460 = vmatprep.subr.mxu0 0.0
    %461 = vmatpush1.xpose.msra.mxu0 0.0
    %462 = vmatprep.subr.mxu0 0.0
    %463 = vmatpush1.xpose.msra.mxu0 0.0
    %464 = vmatprep.subr.mxu0 0.0
    %465 = vmatpush1.xpose.msra.mxu0 0.0
    %466 = vmatprep.subr.mxu0 0.0
    %467 = vmatpush1.xpose.msra.mxu0 0.0
    %468 = vmatprep.mubr.f32.mxu0 0.0
    %469 = vmatmul.mubr.f32.gmra.mrb[0].mxu0 %v394
    %v470 = vpop.f32.mrb[0].mxu0
    %v471 = vadd.f32 0.0, %v470
    %v472 = vpop.f32.mrb[0].mxu0
    %473 = vdwg.mxu0
    %v474 = vsel %vm80, %v378, -inf
    %475 = vmax.xlane.f32.xlu0 %v474
    %v476 = vpop.xlane.xlu0 %475
    %v477 = vsel %vm80, %v471, -inf
    %478 = vmax.xlane.f32.xlu0 %v477
    %v479 = vpop.xlane.xlu0 %478
    %v480 = vsub.f32 %v378, %v476
    %v481 = vsub.f32 %v471, %v479
    %v482 = vmul.f32 %v480, 1.442695
    %v483 = vpow.pop %v482
    %v484 = vmul.f32 %v481, 1.442695
    %v485 = vpow.pop %v484
    %v487 = vsel %vm80, %v483, 0
    %489 = vmatprep.subr.mxu0 0.0
    %490 = vmatpush1.msra.mxu0 %v280
    %491 = vmatprep.subr.mxu0 0.0
    %492 = vmatpush1.msra.mxu0 %v281
    %493 = vmatprep.subr.mxu0 0.0
    %494 = vmatpush1.msra.mxu0 %v282
    %495 = vmatprep.subr.mxu0 0.0
    %496 = vmatpush1.msra.mxu0 %v283
    %497 = vmatprep.subr.mxu0 0.0
    %498 = vmatpush1.msra.mxu0 0.0
    %499 = vmatprep.subr.mxu0 0.0
    %500 = vmatpush1.msra.mxu0 0.0
    %501 = vmatprep.subr.mxu0 0.0
    %502 = vmatpush1.msra.mxu0 0.0
    %503 = vmatprep.subr.mxu0 0.0
    %504 = vmatpush1.msra.mxu0 0.0
    %505 = vmatprep.subr.mxu0 0.0
    %506 = vmatpush1.msra.mxu0 0.0
    %507 = vmatprep.subr.mxu0 0.0
    %508 = vmatpush1.msra.mxu0 0.0
    %509 = vmatprep.subr.mxu0 0.0
    %510 = vmatpush1.msra.mxu0 0.0
    %511 = vmatprep.subr.mxu0 0.0
    %512 = vmatpush1.msra.mxu0 0.0
    %513 = vmatprep.subr.mxu0 0.0
    %514 = vmatpush1.msra.mxu0 0.0
    %515 = vmatprep.subr.mxu0 0.0
    %516 = vmatpush1.msra.mxu0 0.0
    %517 = vmatprep.subr.mxu0 0.0
    %518 = vmatpush1.msra.mxu0 0.0
    %519 = vmatprep.subr.mxu0 0.0
    %520 = vmatpush1.msra.mxu0 0.0
    %521 = vmatprep.subr.mxu0 0.0
    %522 = vmatpush1.msra.mxu0 0.0
    %523 = vmatprep.subr.mxu0 0.0
    %524 = vmatpush1.msra.mxu0 0.0
    %525 = vmatprep.subr.mxu0 0.0
    %526 = vmatpush1.msra.mxu0 0.0
    %527 = vmatprep.subr.mxu0 0.0
    %528 = vmatpush1.msra.mxu0 0.0
    %529 = vmatprep.subr.mxu0 0.0
    %530 = vmatpush1.msra.mxu0 0.0
    %531 = vmatprep.subr.mxu0 0.0
    %532 = vmatpush1.msra.mxu0 0.0
    %533 = vmatprep.subr.mxu0 0.0
    %534 = vmatpush1.msra.mxu0 0.0
    %535 = vmatprep.subr.mxu0 0.0
    %536 = vmatpush1.msra.mxu0 0.0
    %537 = vmatprep.subr.mxu0 0.0
    %538 = vmatpush1.msra.mxu0 0.0
    %539 = vmatprep.subr.mxu0 0.0
    %540 = vmatpush1.msra.mxu0 0.0
    %541 = vmatprep.subr.mxu0 0.0
    %542 = vmatpush1.msra.mxu0 0.0
    %543 = vmatprep.subr.mxu0 0.0
    %544 = vmatpush1.msra.mxu0 0.0
    %545 = vmatprep.subr.mxu0 0.0
    %546 = vmatpush1.msra.mxu0 0.0
    %547 = vmatprep.subr.mxu0 0.0
    %548 = vmatpush1.msra.mxu0 0.0
    %549 = vmatprep.subr.mxu0 0.0
    %550 = vmatpush1.msra.mxu0 0.0
    %551 = vmatprep.subr.mxu0 0.0
    %552 = vmatpush1.msra.mxu0 0.0
    %553 = vmatprep.mubr.f32.mxu0 0.0
    %554 = vmatmul.mubr.f32.gmra.mrb[0].mxu0 %v487
    %v555 = vpop.f32.mrb[0].mxu0
    %v556 = vadd.f32 0.0, %v555
    %v557 = vpop.f32.mrb[0].mxu0
    %558 = vdwg.mxu0
    %v560 = vsel %vm80, %v485, 0
    %562 = vmatprep.subr.mxu0 0.0
    %563 = vmatpush1.msra.mxu0 %v284
    %564 = vmatprep.subr.mxu0 0.0
    %565 = vmatpush1.msra.mxu0 %v285
    %566 = vmatprep.subr.mxu0 0.0
    %567 = vmatpush1.msra.mxu0 %v286
    %568 = vmatprep.subr.mxu0 0.0
    %569 = vmatpush1.msra.mxu0 %v287
    %570 = vmatprep.subr.mxu0 0.0
    %571 = vmatpush1.msra.mxu0 0.0
    %572 = vmatprep.subr.mxu0 0.0
    %573 = vmatpush1.msra.mxu0 0.0
    %574 = vmatprep.subr.mxu0 0.0
    %575 = vmatpush1.msra.mxu0 0.0
    %576 = vmatprep.subr.mxu0 0.0
    %577 = vmatpush1.msra.mxu0 0.0
    %578 = vmatprep.subr.mxu0 0.0
    %579 = vmatpush1.msra.mxu0 0.0
    %580 = vmatprep.subr.mxu0 0.0
    %581 = vmatpush1.msra.mxu0 0.0
    %582 = vmatprep.subr.mxu0 0.0
    %583 = vmatpush1.msra.mxu0 0.0
    %584 = vmatprep.subr.mxu0 0.0
    %585 = vmatpush1.msra.mxu0 0.0
    %586 = vmatprep.subr.mxu0 0.0
    %587 = vmatpush1.msra.mxu0 0.0
    %588 = vmatprep.subr.mxu0 0.0
    %589 = vmatpush1.msra.mxu0 0.0
    %590 = vmatprep.subr.mxu0 0.0
    %591 = vmatpush1.msra.mxu0 0.0
    %592 = vmatprep.subr.mxu0 0.0
    %593 = vmatpush1.msra.mxu0 0.0
    %594 = vmatprep.subr.mxu0 0.0
    %595 = vmatpush1.msra.mxu0 0.0
    %596 = vmatprep.subr.mxu0 0.0
    %597 = vmatpush1.msra.mxu0 0.0
    %598 = vmatprep.subr.mxu0 0.0
    %599 = vmatpush1.msra.mxu0 0.0
    %600 = vmatprep.subr.mxu0 0.0
    %601 = vmatpush1.msra.mxu0 0.0
    %602 = vmatprep.subr.mxu0 0.0
    %603 = vmatpush1.msra.mxu0 0.0
    %604 = vmatprep.subr.mxu0 0.0
    %605 = vmatpush1.msra.mxu0 0.0
    %606 = vmatprep.subr.mxu0 0.0
    %607 = vmatpush1.msra.mxu0 0.0
    %608 = vmatprep.subr.mxu0 0.0
    %609 = vmatpush1.msra.mxu0 0.0
    %610 = vmatprep.subr.mxu0 0.0
    %611 = vmatpush1.msra.mxu0 0.0
    %612 = vmatprep.subr.mxu0 0.0
    %613 = vmatpush1.msra.mxu0 0.0
    %614 = vmatprep.subr.mxu0 0.0
    %615 = vmatpush1.msra.mxu0 0.0
    %616 = vmatprep.subr.mxu0 0.0
    %617 = vmatpush1.msra.mxu0 0.0
    %618 = vmatprep.subr.mxu0 0.0
    %619 = vmatpush1.msra.mxu0 0.0
    %620 = vmatprep.subr.mxu0 0.0
    %621 = vmatpush1.msra.mxu0 0.0
    %622 = vmatprep.subr.mxu0 0.0
    %623 = vmatpush1.msra.mxu0 0.0
    %624 = vmatprep.subr.mxu0 0.0
    %625 = vmatpush1.msra.mxu0 0.0
    %626 = vmatprep.mubr.f32.mxu0 0.0
    %627 = vmatmul.mubr.f32.gmra.mrb[0].mxu0 %v560
    %v628 = vpop.f32.mrb[0].mxu0
    %v629 = vadd.f32 0.0, %v628
    %v630 = vpop.f32.mrb[0].mxu0
    %631 = vdwg.mxu0
    %v632 = vrcp.pop %v556
    %v633 = vrcp.pop %v629
    %636 = vrot.lane.b32.xlu0 %v632, 96
    %v637 = vpop.permute.xlu0 %636
    %638 = vrot.lane.b32.xlu0 %v633, 96
    %v639 = vpop.permute.xlu0 %638
    %v642 = vmul.f32 %v556, %v637
    %v643 = vmul.f32 %v629, %v639
    %v644 = vld [vmem:[#allocation6] sm:$0xff]
    %v645 = vld [vmem:[#allocation6 + $0x8] sm:$0xff]
    %v646 = vld [vmem:[#allocation6 + $0x10] sm:$0xff]
    %v647 = vld [vmem:[#allocation6 + $0x18] sm:$0xff]
    %v648 = vld [vmem:[%s4] sm:$0x1]
    %v650 = vlaneseq
    %v651 = vshrl.u32 %v650, 7
    %v652 = vsub.s32 0, %v651
    %v653 = vrot.slane %v648, %v652
    %v656 = vsel %vm80, %v642, 0
    %v659 = vsel %vm80, %v643, 0
    %661 = vmatprep.subr.mxu0 0.0
    %662 = vmatpush1.msra.mxu0 %v644
    %663 = vmatprep.subr.mxu0 0.0
    %664 = vmatpush1.msra.mxu0 %v645
    %665 = vmatprep.subr.mxu0 0.0
    %666 = vmatpush1.msra.mxu0 %v646
    %667 = vmatprep.subr.mxu0 0.0
    %668 = vmatpush1.msra.mxu0 %v647
    %669 = vmatprep.subr.mxu0 0.0
    %670 = vmatpush1.msra.mxu0 0.0
    %671 = vmatprep.subr.mxu0 0.0
    %672 = vmatpush1.msra.mxu0 0.0
    %673 = vmatprep.subr.mxu0 0.0
    %674 = vmatpush1.msra.mxu0 0.0
    %675 = vmatprep.subr.mxu0 0.0
    %676 = vmatpush1.msra.mxu0 0.0
    %677 = vmatprep.subr.mxu0 0.0
    %678 = vmatpush1.msra.mxu0 0.0
    %679 = vmatprep.subr.mxu0 0.0
    %680 = vmatpush1.msra.mxu0 0.0
    %681 = vmatprep.subr.mxu0 0.0
    %682 = vmatpush1.msra.mxu0 0.0
    %683 = vmatprep.subr.mxu0 0.0
    %684 = vmatpush1.msra.mxu0 0.0
    %685 = vmatprep.subr.mxu0 0.0
    %686 = vmatpush1.msra.mxu0 0.0
    %687 = vmatprep.subr.mxu0 0.0
    %688 = vmatpush1.msra.mxu0 0.0
    %689 = vmatprep.subr.mxu0 0.0
    %690 = vmatpush1.msra.mxu0 0.0
    %691 = vmatprep.subr.mxu0 0.0
    %692 = vmatpush1.msra.mxu0 0.0
    %693 = vmatprep.subr.mxu0 0.0
    %694 = vmatpush1.msra.mxu0 0.0
    %695 = vmatprep.subr.mxu0 0.0
    %696 = vmatpush1.msra.mxu0 0.0
    %697 = vmatprep.subr.mxu0 0.0
    %698 = vmatpush1.msra.mxu0 0.0
    %699 = vmatprep.subr.mxu0 0.0
    %700 = vmatpush1.msra.mxu0 0.0
    %701 = vmatprep.subr.mxu0 0.0
    %702 = vmatpush1.msra.mxu0 0.0
    %703 = vmatprep.subr.mxu0 0.0
    %704 = vmatpush1.msra.mxu0 0.0
    %705 = vmatprep.subr.mxu0 0.0
    %706 = vmatpush1.msra.mxu0 0.0
    %707 = vmatprep.subr.mxu0 0.0
    %708 = vmatpush1.msra.mxu0 0.0
    %709 = vmatprep.subr.mxu0 0.0
    %710 = vmatpush1.msra.mxu0 0.0
    %711 = vmatprep.subr.mxu0 0.0
    %712 = vmatpush1.msra.mxu0 0.0
    %713 = vmatprep.subr.mxu0 0.0
    %714 = vmatpush1.msra.mxu0 0.0
    %715 = vmatprep.subr.mxu0 0.0
    %716 = vmatpush1.msra.mxu0 0.0
    %717 = vmatprep.subr.mxu0 0.0
    %718 = vmatpush1.msra.mxu0 0.0
    %719 = vmatprep.subr.mxu0 0.0
    %720 = vmatpush1.msra.mxu0 0.0
    %721 = vmatprep.subr.mxu0 0.0
    %722 = vmatpush1.msra.mxu0 0.0
    %723 = vmatprep.subr.mxu0 0.0
    %724 = vmatpush1.msra.mxu0 0.0
    %725 = vmatprep.mubr.f32.mxu0 0.0
    %726 = vmatmul.mubr.f32.gmra.mrb[0].mxu0 %v656
    %v727 = vpop.f32.mrb[0].mxu0
    %v728 = vadd.f32 %v653, %v727
    %v729 = vpop.f32.mrb[0].mxu0
    %730 = vmatprep.mubr.f32.mxu0 0.0
    %731 = vmatmul.mubr.f32.gmra.mrb[0].mxu0 %v659
    %v732 = vpop.f32.mrb[0].mxu0
    %v733 = vadd.f32 %v653, %v732
    %v734 = vpop.f32.mrb[0].mxu0
    %735 = vdwg.mxu0
    %v736 = vld [vmem:[#allocation2] sm:$0xff]
    %v737 = vld [vmem:[#allocation2 + $0x8] sm:$0xff]
    %v738 = vadd.f32 %v728, %v736
    %v739 = vadd.f32 %v733, %v737
    %v742 = vrot.slane %v739, 7
    %vm743 = vcmask 1041409
    %v744 = vsel %vm743, %v742, %v738
    %v746 = vrot.slane %v738, 1
    %v747 = vsel %vm743, %v739, %v746
    %748 = vrot.lane.b32.xlu0 %v747, 32
    %v749 = vpop.permute.xlu0 %748
    %v751 = vrot.slane %v738, 2
    %v752 = vrot.slane %v739, 1
    %v753 = vsel %vm743, %v752, %v751
    %754 = vrot.lane.b32.xlu0 %v753, 64
    %v755 = vpop.permute.xlu0 %754
    %v757 = vrot.slane %v738, 3
    %v758 = vrot.slane %v739, 2
    %v759 = vsel %vm743, %v758, %v757
    %760 = vrot.lane.b32.xlu0 %v759, 96
    %v761 = vpop.permute.xlu0 %760
    %v763 = vrot.slane %v738, 4
    %v764 = vrot.slane %v739, 3
    %v765 = vsel %vm743, %v764, %v763
    %v767 = vrot.slane %v738, 5
    %v768 = vrot.slane %v739, 4
    %v769 = vsel %vm743, %v768, %v767
    %770 = vrot.lane.b32.xlu0 %v769, 32
    %v771 = vpop.permute.xlu0 %770
    %v773 = vrot.slane %v738, 6
    %v774 = vrot.slane %v739, 5
    %v775 = vsel %vm743, %v774, %v773
    %776 = vrot.lane.b32.xlu0 %v775, 64
    %v777 = vpop.permute.xlu0 %776
    %v779 = vrot.slane %v738, 7
    %v780 = vrot.slane %v739, 6
    %v781 = vsel %vm743, %v780, %v779
    %782 = vrot.lane.b32.xlu0 %v781, 96
    %v783 = vpop.permute.xlu0 %782
    %v785 = vsel %vm80, %v744, %v749
    %vm786 = vcmask 523264
    %v787 = vsel %vm786, %v785, %v755
    %vm788 = vcmask 785408
    %v789 = vsel %vm788, %v787, %v761
    %v790 = vsel %vm80, %v765, %v771
    %v791 = vsel %vm786, %v790, %v777
    %v792 = vsel %vm788, %v791, %v783
    %v795 = vcombine.low %v789, %v792
    %v797 = vunpack.c.l.s4 1983009808
    %v798 = vunpack.c.0.s8 %v797
    %v799 = vlaneseq
    %v800 = vshrl.u32 %v799, 7
    %v801 = vsub.s32 %v798, %v800
    %v802 = vrot.slane %v795, %v801
    %804 = vst [vmem:[%s6] sm:$0xf] %v802
    // Predicated region
    $region42: #{la_block.1} parent=1 // pred_check
      _
    $region43: #{la_block.1} parent=1 // pred_check_branch
      %806 = sbr.rel (0) target = $region45
    $region44: #{la_block.1} parent=1 // pred_region
      _
    $region45: #{la_block.1} parent=1 // pred_fallthru
      _
    // Predicated region
    $region46: #{la_block.1} parent=1 // pred_check
      _
    $region47: #{la_block.1} parent=1 // pred_check_branch
      %808 = sbr.rel (0) target = $region49
    $region48: #{la_block.1} parent=1 // pred_region
      _
    $region49: #{la_block.1} parent=1 // pred_fallthru
      _
    %809 = vsyncpa [#allocation3], 1
    %810 = vsyncpa [#allocation5], 1
    %811 = vsyncpa [#allocation8], 1

</llo_original>
